<compile_context>
chip_gen: v7x
topology: tpu7x:2x2x1
jax: 0.10.0
libtpu: 0.0.40
codegen_flags: <defaults>
</compile_context>

<pallas_src>
import functools

import jax
import jax.numpy as jnp
import numpy as np
from jax.experimental import pallas as pl
from jax.experimental.pallas import tpu as pltpu

V_THRESHOLD = 1.0
V_RESET = 0.0


def _temporal_block_kernel(num_layers, num_steps, batch, tau, z_ref, w_ref, o_ref):
    """Single-invocation, layer-major TemporalBlock.

    z_ref: [N*B, D] f32   temporal-mean input (row n*B + b == patch n, batch b)
    w_ref: [L, D, D] f32  stacked transposed Linear weights (x @ W^T convention)
    o_ref: [N*B, D] f32   output spikes of the last layer (single store at the end)
    """
    inv_tau = jnp.float32(1.0 / tau)
    d = z_ref.shape[-1]
    z = z_ref[...]                                              # [N*B, D] in vregs

    for l in range(num_layers):                                 # static, small
        # One batched MXU matmul per layer over ALL (n, b) rows at once.
        h = jnp.dot(z, w_ref[l], preferred_element_type=jnp.float32)   # [N*B, D]

        # Multi-step LIF over n: membrane `v` carried in vector registers.
        v = jnp.zeros((batch, d), dtype=jnp.float32)
        spikes = []
        for n in range(num_steps):                              # static unroll
            hn = h[n * batch:(n + 1) * batch, :]                # [B, D] value slice
            v = v + (hn - v) * inv_tau                          # leaky integrate
            fired = v >= V_THRESHOLD                            # spike condition (once)
            spikes.append(fired.astype(jnp.float32))
            v = jnp.where(fired, jnp.float32(V_RESET), v)       # hard reset
        z = jnp.concatenate(spikes, axis=0)                     # [N*B, D] stays in vregs

    o_ref[...] = z                                              # single lane-dense store


def temporal_block_forward(x, weights, tau=2.0):
    """x: [T, B, N, D] float32 (PyTorch layout, T == N).
    weights: list of [D, D] float32 (W^T of each layer's bias-free Linear).
    Returns [N, B, 1, D] float32 (same as the PyTorch module)."""
    T, B, N, D = x.shape
    assert N == T, f"num_patches ({N}) is not equivalent to time steps ({T})."
    num_layers = len(weights)

    # Temporal mean: one reduction pass over x in its original layout; only the tiny
    # [B, N, D] result is transposed/flattened (layout glue, done by XLA).
    z = jnp.mean(x, axis=0)                                     # [B, N, D]
    z = jnp.transpose(z, (1, 0, 2)).reshape(N * B, D)           # [N*B, D]
    w = jnp.stack(weights, axis=0).astype(jnp.float32)          # [L, D, D]

    kernel = functools.partial(_temporal_block_kernel, num_layers, N, B, float(tau))

    out = pl.pallas_call(
        kernel,
        out_shape=jax.ShapeDtypeStruct((N * B, D), jnp.float32),
        grid_spec=pltpu.PrefetchScalarGridSpec(
            num_scalar_prefetch=0,
            grid=(1,),
            in_specs=[
                pl.BlockSpec((N * B, D), lambda i: (0, 0)),
                pl.BlockSpec((num_layers, D, D), lambda i: (0, 0, 0)),
            ],
            out_specs=pl.BlockSpec((N * B, D), lambda i: (0, 0)),
        ),
        compiler_params=pltpu.CompilerParams(
            dimension_semantics=("arbitrary",)),
    )(z, w)

    return out.reshape(N, B, D)[:, :, None, :]                  # [N, B, 1, D]


def ref_forward(x, weights, tau=2.0):
    """Pure-JAX reference mirroring the PyTorch semantics."""
    z = jnp.transpose(jnp.mean(x, axis=0), (1, 0, 2))           # [N, B, D]
    for w in weights:
        def step(v, zn, w=w):
            h = jnp.dot(zn, w, preferred_element_type=jnp.float32)
            v = v + (h - v) / tau
            s = (v >= V_THRESHOLD).astype(zn.dtype)
            v = jnp.where(s > 0.0, V_RESET, v)
            return v, s
        _, z = jax.lax.scan(step, jnp.zeros(z.shape[1:], z.dtype), z)
    return z[:, :, None, :]


if __name__ == "__main__":
    # Small shapes consistent with the module: T == N (assert in forward); D lane-dense.
    T = N = 8
    B = 2
    D = 128
    NUM_LAYERS = 2
    TAU = 2.0

    key = jax.random.PRNGKey(0)
    keys = jax.random.split(key, NUM_LAYERS + 1)

    # Quantize inputs/weights to coarse dyadic grids so every matmul / LIF update is
    # exact in f32 (and in bf16-split MXU passes) -> the spike threshold comparisons are
    # bitwise identical between the kernel and the reference.
    x = jax.random.normal(keys[0], (T, B, N, D), dtype=jnp.float32)
    x = jnp.clip(jnp.round(x * 4.0) / 4.0, -4.0, 4.0)           # multiples of 1/4
    weights = []
    for l in range(NUM_LAYERS):
        w = jax.random.normal(keys[1 + l], (D, D), dtype=jnp.float32)
        w = jnp.clip(jnp.round(w * 4.0) / 8.0, -2.0, 2.0)       # multiples of 1/8, std~0.5
        weights.append(w)

    out = jax.block_until_ready(temporal_block_forward(x, weights, tau=TAU))
    ref = jax.block_until_ready(ref_forward(x, weights, tau=TAU))

    assert out.shape == (N, B, 1, D), out.shape
    np.testing.assert_allclose(np.asarray(out), np.asarray(ref), atol=1e-6)

    print("KERNEL_OK")
</pallas_src>

<mosaic_0001>
module attributes {stable_mosaic.version = 11 : i64} {
  func.func @_temporal_block_kernel(%arg0: i32, %arg1: memref<16x128xf32, #tpu.memory_space<vmem>>, %arg2: memref<2x128x128xf32, #tpu.memory_space<vmem>>, %arg3: memref<16x128xf32, #tpu.memory_space<vmem>>) attributes {dimension_semantics = [#tpu.dimension_semantics<arbitrary>], iteration_bounds = array<i64: 1>, scalar_prefetch = 0 : i64, scratch_operands = 0 : i64, tpu.core_type = #tpu.core_type<tc>, window_params = [{pipeline_mode = #tpu.pipeline_mode<synchronous>, transform_indices = @transform_0, window_bounds = array<i64: 16, 128>}, {pipeline_mode = #tpu.pipeline_mode<synchronous>, transform_indices = @transform_1, window_bounds = array<i64: 2, 128, 128>}, {pipeline_mode = #tpu.pipeline_mode<synchronous>, transform_indices = @transform_2, window_bounds = array<i64: 16, 128>}]} {
    %c0 = arith.constant 0 : index
    %c0_0 = arith.constant 0 : index
    %0 = vector.load %arg1[%c0, %c0_0] : memref<16x128xf32, #tpu.memory_space<vmem>>, vector<16x128xf32>
    %c0_1 = arith.constant 0 : index
    %c0_2 = arith.constant 0 : index
    %c0_3 = arith.constant 0 : index
    %1 = vector.load %arg2[%c0_1, %c0_2, %c0_3] : memref<2x128x128xf32, #tpu.memory_space<vmem>>, vector<1x128x128xf32>
    %2 = vector.shape_cast %1 : vector<1x128x128xf32> to vector<128x128xf32>
    %cst = arith.constant dense<0.000000e+00> : vector<16x128xf32>
    %3 = tpu.matmul %0, %2, %cst {dimension_numbers = #tpu.dot_dimension_numbers<[1], [0], [0], [1], [0, 0, 1, 1], [], []>} : vector<16x128xf32>, vector<128x128xf32>, vector<16x128xf32> -> vector<16x128xf32>
    %cst_4 = arith.constant 0.000000e+00 : f32
    %4 = vector.broadcast %cst_4 : f32 to vector<2x128xf32>
    %5 = vector.extract_strided_slice %3 {offsets = [0, 0], sizes = [2, 128], strides = [1, 1]} : vector<16x128xf32> to vector<2x128xf32>
    %6 = arith.subf %5, %4 : vector<2x128xf32>
    %cst_5 = arith.constant 5.000000e-01 : f32
    %7 = vector.broadcast %cst_5 : f32 to vector<2x128xf32>
    %8 = arith.mulf %6, %7 : vector<2x128xf32>
    %9 = arith.addf %4, %8 : vector<2x128xf32>
    %cst_6 = arith.constant 1.000000e+00 : f32
    %10 = vector.broadcast %cst_6 : f32 to vector<2x128xf32>
    %11 = arith.cmpf oge, %9, %10 : vector<2x128xf32>
    %12 = arith.extui %11 : vector<2x128xi1> to vector<2x128xi32>
    %13 = arith.sitofp %12 : vector<2x128xi32> to vector<2x128xf32>
    %cst_7 = arith.constant 0.000000e+00 : f32
    %14 = vector.broadcast %cst_7 : f32 to vector<2x128xf32>
    %15 = arith.select %11, %14, %9 : vector<2x128xi1>, vector<2x128xf32>
    %16 = vector.extract_strided_slice %3 {offsets = [2, 0], sizes = [2, 128], strides = [1, 1]} : vector<16x128xf32> to vector<2x128xf32>
    %17 = arith.subf %16, %15 : vector<2x128xf32>
    %cst_8 = arith.constant 5.000000e-01 : f32
    %18 = vector.broadcast %cst_8 : f32 to vector<2x128xf32>
    %19 = arith.mulf %17, %18 : vector<2x128xf32>
    %20 = arith.addf %15, %19 : vector<2x128xf32>
    %cst_9 = arith.constant 1.000000e+00 : f32
    %21 = vector.broadcast %cst_9 : f32 to vector<2x128xf32>
    %22 = arith.cmpf oge, %20, %21 : vector<2x128xf32>
    %23 = arith.extui %22 : vector<2x128xi1> to vector<2x128xi32>
    %24 = arith.sitofp %23 : vector<2x128xi32> to vector<2x128xf32>
    %cst_10 = arith.constant 0.000000e+00 : f32
    %25 = vector.broadcast %cst_10 : f32 to vector<2x128xf32>
    %26 = arith.select %22, %25, %20 : vector<2x128xi1>, vector<2x128xf32>
    %27 = vector.extract_strided_slice %3 {offsets = [4, 0], sizes = [2, 128], strides = [1, 1]} : vector<16x128xf32> to vector<2x128xf32>
    %28 = arith.subf %27, %26 : vector<2x128xf32>
    %cst_11 = arith.constant 5.000000e-01 : f32
    %29 = vector.broadcast %cst_11 : f32 to vector<2x128xf32>
    %30 = arith.mulf %28, %29 : vector<2x128xf32>
    %31 = arith.addf %26, %30 : vector<2x128xf32>
    %cst_12 = arith.constant 1.000000e+00 : f32
    %32 = vector.broadcast %cst_12 : f32 to vector<2x128xf32>
    %33 = arith.cmpf oge, %31, %32 : vector<2x128xf32>
    %34 = arith.extui %33 : vector<2x128xi1> to vector<2x128xi32>
    %35 = arith.sitofp %34 : vector<2x128xi32> to vector<2x128xf32>
    %cst_13 = arith.constant 0.000000e+00 : f32
    %36 = vector.broadcast %cst_13 : f32 to vector<2x128xf32>
    %37 = arith.select %33, %36, %31 : vector<2x128xi1>, vector<2x128xf32>
    %38 = vector.extract_strided_slice %3 {offsets = [6, 0], sizes = [2, 128], strides = [1, 1]} : vector<16x128xf32> to vector<2x128xf32>
    %39 = arith.subf %38, %37 : vector<2x128xf32>
    %cst_14 = arith.constant 5.000000e-01 : f32
    %40 = vector.broadcast %cst_14 : f32 to vector<2x128xf32>
    %41 = arith.mulf %39, %40 : vector<2x128xf32>
    %42 = arith.addf %37, %41 : vector<2x128xf32>
    %cst_15 = arith.constant 1.000000e+00 : f32
    %43 = vector.broadcast %cst_15 : f32 to vector<2x128xf32>
    %44 = arith.cmpf oge, %42, %43 : vector<2x128xf32>
    %45 = arith.extui %44 : vector<2x128xi1> to vector<2x128xi32>
    %46 = arith.sitofp %45 : vector<2x128xi32> to vector<2x128xf32>
    %cst_16 = arith.constant 0.000000e+00 : f32
    %47 = vector.broadcast %cst_16 : f32 to vector<2x128xf32>
    %48 = arith.select %44, %47, %42 : vector<2x128xi1>, vector<2x128xf32>
    %49 = vector.extract_strided_slice %3 {offsets = [8, 0], sizes = [2, 128], strides = [1, 1]} : vector<16x128xf32> to vector<2x128xf32>
    %50 = arith.subf %49, %48 : vector<2x128xf32>
    %cst_17 = arith.constant 5.000000e-01 : f32
    %51 = vector.broadcast %cst_17 : f32 to vector<2x128xf32>
    %52 = arith.mulf %50, %51 : vector<2x128xf32>
    %53 = arith.addf %48, %52 : vector<2x128xf32>
    %cst_18 = arith.constant 1.000000e+00 : f32
    %54 = vector.broadcast %cst_18 : f32 to vector<2x128xf32>
    %55 = arith.cmpf oge, %53, %54 : vector<2x128xf32>
    %56 = arith.extui %55 : vector<2x128xi1> to vector<2x128xi32>
    %57 = arith.sitofp %56 : vector<2x128xi32> to vector<2x128xf32>
    %cst_19 = arith.constant 0.000000e+00 : f32
    %58 = vector.broadcast %cst_19 : f32 to vector<2x128xf32>
    %59 = arith.select %55, %58, %53 : vector<2x128xi1>, vector<2x128xf32>
    %60 = vector.extract_strided_slice %3 {offsets = [10, 0], sizes = [2, 128], strides = [1, 1]} : vector<16x128xf32> to vector<2x128xf32>
    %61 = arith.subf %60, %59 : vector<2x128xf32>
    %cst_20 = arith.constant 5.000000e-01 : f32
    %62 = vector.broadcast %cst_20 : f32 to vector<2x128xf32>
    %63 = arith.mulf %61, %62 : vector<2x128xf32>
    %64 = arith.addf %59, %63 : vector<2x128xf32>
    %cst_21 = arith.constant 1.000000e+00 : f32
    %65 = vector.broadcast %cst_21 : f32 to vector<2x128xf32>
    %66 = arith.cmpf oge, %64, %65 : vector<2x128xf32>
    %67 = arith.extui %66 : vector<2x128xi1> to vector<2x128xi32>
    %68 = arith.sitofp %67 : vector<2x128xi32> to vector<2x128xf32>
    %cst_22 = arith.constant 0.000000e+00 : f32
    %69 = vector.broadcast %cst_22 : f32 to vector<2x128xf32>
    %70 = arith.select %66, %69, %64 : vector<2x128xi1>, vector<2x128xf32>
    %71 = vector.extract_strided_slice %3 {offsets = [12, 0], sizes = [2, 128], strides = [1, 1]} : vector<16x128xf32> to vector<2x128xf32>
    %72 = arith.subf %71, %70 : vector<2x128xf32>
    %cst_23 = arith.constant 5.000000e-01 : f32
    %73 = vector.broadcast %cst_23 : f32 to vector<2x128xf32>
    %74 = arith.mulf %72, %73 : vector<2x128xf32>
    %75 = arith.addf %70, %74 : vector<2x128xf32>
    %cst_24 = arith.constant 1.000000e+00 : f32
    %76 = vector.broadcast %cst_24 : f32 to vector<2x128xf32>
    %77 = arith.cmpf oge, %75, %76 : vector<2x128xf32>
    %78 = arith.extui %77 : vector<2x128xi1> to vector<2x128xi32>
    %79 = arith.sitofp %78 : vector<2x128xi32> to vector<2x128xf32>
    %cst_25 = arith.constant 0.000000e+00 : f32
    %80 = vector.broadcast %cst_25 : f32 to vector<2x128xf32>
    %81 = arith.select %77, %80, %75 : vector<2x128xi1>, vector<2x128xf32>
    %82 = vector.extract_strided_slice %3 {offsets = [14, 0], sizes = [2, 128], strides = [1, 1]} : vector<16x128xf32> to vector<2x128xf32>
    %83 = arith.subf %82, %81 : vector<2x128xf32>
    %cst_26 = arith.constant 5.000000e-01 : f32
    %84 = vector.broadcast %cst_26 : f32 to vector<2x128xf32>
    %85 = arith.mulf %83, %84 : vector<2x128xf32>
    %86 = arith.addf %81, %85 : vector<2x128xf32>
    %cst_27 = arith.constant 1.000000e+00 : f32
    %87 = vector.broadcast %cst_27 : f32 to vector<2x128xf32>
    %88 = arith.cmpf oge, %86, %87 : vector<2x128xf32>
    %89 = arith.extui %88 : vector<2x128xi1> to vector<2x128xi32>
    %90 = arith.sitofp %89 : vector<2x128xi32> to vector<2x128xf32>
    %91 = tpu.concatenate %13, %24, %35, %46, %57, %68, %79, %90 in 0 : vector<2x128xf32>, vector<2x128xf32>, vector<2x128xf32>, vector<2x128xf32>, vector<2x128xf32>, vector<2x128xf32>, vector<2x128xf32>, vector<2x128xf32> -> vector<16x128xf32>
    %c1 = arith.constant 1 : index
    %c0_28 = arith.constant 0 : index
    %c0_29 = arith.constant 0 : index
    %92 = vector.load %arg2[%c1, %c0_28, %c0_29] : memref<2x128x128xf32, #tpu.memory_space<vmem>>, vector<1x128x128xf32>
    %93 = vector.shape_cast %92 : vector<1x128x128xf32> to vector<128x128xf32>
    %cst_30 = arith.constant dense<0.000000e+00> : vector<16x128xf32>
    %94 = tpu.matmul %91, %93, %cst_30 {dimension_numbers = #tpu.dot_dimension_numbers<[1], [0], [0], [1], [0, 0, 1, 1], [], []>} : vector<16x128xf32>, vector<128x128xf32>, vector<16x128xf32> -> vector<16x128xf32>
    %cst_31 = arith.constant 0.000000e+00 : f32
    %95 = vector.broadcast %cst_31 : f32 to vector<2x128xf32>
    %96 = vector.extract_strided_slice %94 {offsets = [0, 0], sizes = [2, 128], strides = [1, 1]} : vector<16x128xf32> to vector<2x128xf32>
    %97 = arith.subf %96, %95 : vector<2x128xf32>
    %cst_32 = arith.constant 5.000000e-01 : f32
    %98 = vector.broadcast %cst_32 : f32 to vector<2x128xf32>
    %99 = arith.mulf %97, %98 : vector<2x128xf32>
    %100 = arith.addf %95, %99 : vector<2x128xf32>
    %cst_33 = arith.constant 1.000000e+00 : f32
    %101 = vector.broadcast %cst_33 : f32 to vector<2x128xf32>
    %102 = arith.cmpf oge, %100, %101 : vector<2x128xf32>
    %103 = arith.extui %102 : vector<2x128xi1> to vector<2x128xi32>
    %104 = arith.sitofp %103 : vector<2x128xi32> to vector<2x128xf32>
    %cst_34 = arith.constant 0.000000e+00 : f32
    %105 = vector.broadcast %cst_34 : f32 to vector<2x128xf32>
    %106 = arith.select %102, %105, %100 : vector<2x128xi1>, vector<2x128xf32>
    %107 = vector.extract_strided_slice %94 {offsets = [2, 0], sizes = [2, 128], strides = [1, 1]} : vector<16x128xf32> to vector<2x128xf32>
    %108 = arith.subf %107, %106 : vector<2x128xf32>
    %cst_35 = arith.constant 5.000000e-01 : f32
    %109 = vector.broadcast %cst_35 : f32 to vector<2x128xf32>
    %110 = arith.mulf %108, %109 : vector<2x128xf32>
    %111 = arith.addf %106, %110 : vector<2x128xf32>
    %cst_36 = arith.constant 1.000000e+00 : f32
    %112 = vector.broadcast %cst_36 : f32 to vector<2x128xf32>
    %113 = arith.cmpf oge, %111, %112 : vector<2x128xf32>
    %114 = arith.extui %113 : vector<2x128xi1> to vector<2x128xi32>
    %115 = arith.sitofp %114 : vector<2x128xi32> to vector<2x128xf32>
    %cst_37 = arith.constant 0.000000e+00 : f32
    %116 = vector.broadcast %cst_37 : f32 to vector<2x128xf32>
    %117 = arith.select %113, %116, %111 : vector<2x128xi1>, vector<2x128xf32>
    %118 = vector.extract_strided_slice %94 {offsets = [4, 0], sizes = [2, 128], strides = [1, 1]} : vector<16x128xf32> to vector<2x128xf32>
    %119 = arith.subf %118, %117 : vector<2x128xf32>
    %cst_38 = arith.constant 5.000000e-01 : f32
    %120 = vector.broadcast %cst_38 : f32 to vector<2x128xf32>
    %121 = arith.mulf %119, %120 : vector<2x128xf32>
    %122 = arith.addf %117, %121 : vector<2x128xf32>
    %cst_39 = arith.constant 1.000000e+00 : f32
    %123 = vector.broadcast %cst_39 : f32 to vector<2x128xf32>
    %124 = arith.cmpf oge, %122, %123 : vector<2x128xf32>
    %125 = arith.extui %124 : vector<2x128xi1> to vector<2x128xi32>
    %126 = arith.sitofp %125 : vector<2x128xi32> to vector<2x128xf32>
    %cst_40 = arith.constant 0.000000e+00 : f32
    %127 = vector.broadcast %cst_40 : f32 to vector<2x128xf32>
    %128 = arith.select %124, %127, %122 : vector<2x128xi1>, vector<2x128xf32>
    %129 = vector.extract_strided_slice %94 {offsets = [6, 0], sizes = [2, 128], strides = [1, 1]} : vector<16x128xf32> to vector<2x128xf32>
    %130 = arith.subf %129, %128 : vector<2x128xf32>
    %cst_41 = arith.constant 5.000000e-01 : f32
    %131 = vector.broadcast %cst_41 : f32 to vector<2x128xf32>
    %132 = arith.mulf %130, %131 : vector<2x128xf32>
    %133 = arith.addf %128, %132 : vector<2x128xf32>
    %cst_42 = arith.constant 1.000000e+00 : f32
    %134 = vector.broadcast %cst_42 : f32 to vector<2x128xf32>
    %135 = arith.cmpf oge, %133, %134 : vector<2x128xf32>
    %136 = arith.extui %135 : vector<2x128xi1> to vector<2x128xi32>
    %137 = arith.sitofp %136 : vector<2x128xi32> to vector<2x128xf32>
    %cst_43 = arith.constant 0.000000e+00 : f32
    %138 = vector.broadcast %cst_43 : f32 to vector<2x128xf32>
    %139 = arith.select %135, %138, %133 : vector<2x128xi1>, vector<2x128xf32>
    %140 = vector.extract_strided_slice %94 {offsets = [8, 0], sizes = [2, 128], strides = [1, 1]} : vector<16x128xf32> to vector<2x128xf32>
    %141 = arith.subf %140, %139 : vector<2x128xf32>
    %cst_44 = arith.constant 5.000000e-01 : f32
    %142 = vector.broadcast %cst_44 : f32 to vector<2x128xf32>
    %143 = arith.mulf %141, %142 : vector<2x128xf32>
    %144 = arith.addf %139, %143 : vector<2x128xf32>
    %cst_45 = arith.constant 1.000000e+00 : f32
    %145 = vector.broadcast %cst_45 : f32 to vector<2x128xf32>
    %146 = arith.cmpf oge, %144, %145 : vector<2x128xf32>
    %147 = arith.extui %146 : vector<2x128xi1> to vector<2x128xi32>
    %148 = arith.sitofp %147 : vector<2x128xi32> to vector<2x128xf32>
    %cst_46 = arith.constant 0.000000e+00 : f32
    %149 = vector.broadcast %cst_46 : f32 to vector<2x128xf32>
    %150 = arith.select %146, %149, %144 : vector<2x128xi1>, vector<2x128xf32>
    %151 = vector.extract_strided_slice %94 {offsets = [10, 0], sizes = [2, 128], strides = [1, 1]} : vector<16x128xf32> to vector<2x128xf32>
    %152 = arith.subf %151, %150 : vector<2x128xf32>
    %cst_47 = arith.constant 5.000000e-01 : f32
    %153 = vector.broadcast %cst_47 : f32 to vector<2x128xf32>
    %154 = arith.mulf %152, %153 : vector<2x128xf32>
    %155 = arith.addf %150, %154 : vector<2x128xf32>
    %cst_48 = arith.constant 1.000000e+00 : f32
    %156 = vector.broadcast %cst_48 : f32 to vector<2x128xf32>
    %157 = arith.cmpf oge, %155, %156 : vector<2x128xf32>
    %158 = arith.extui %157 : vector<2x128xi1> to vector<2x128xi32>
    %159 = arith.sitofp %158 : vector<2x128xi32> to vector<2x128xf32>
    %cst_49 = arith.constant 0.000000e+00 : f32
    %160 = vector.broadcast %cst_49 : f32 to vector<2x128xf32>
    %161 = arith.select %157, %160, %155 : vector<2x128xi1>, vector<2x128xf32>
    %162 = vector.extract_strided_slice %94 {offsets = [12, 0], sizes = [2, 128], strides = [1, 1]} : vector<16x128xf32> to vector<2x128xf32>
    %163 = arith.subf %162, %161 : vector<2x128xf32>
    %cst_50 = arith.constant 5.000000e-01 : f32
    %164 = vector.broadcast %cst_50 : f32 to vector<2x128xf32>
    %165 = arith.mulf %163, %164 : vector<2x128xf32>
    %166 = arith.addf %161, %165 : vector<2x128xf32>
    %cst_51 = arith.constant 1.000000e+00 : f32
    %167 = vector.broadcast %cst_51 : f32 to vector<2x128xf32>
    %168 = arith.cmpf oge, %166, %167 : vector<2x128xf32>
    %169 = arith.extui %168 : vector<2x128xi1> to vector<2x128xi32>
    %170 = arith.sitofp %169 : vector<2x128xi32> to vector<2x128xf32>
    %cst_52 = arith.constant 0.000000e+00 : f32
    %171 = vector.broadcast %cst_52 : f32 to vector<2x128xf32>
    %172 = arith.select %168, %171, %166 : vector<2x128xi1>, vector<2x128xf32>
    %173 = vector.extract_strided_slice %94 {offsets = [14, 0], sizes = [2, 128], strides = [1, 1]} : vector<16x128xf32> to vector<2x128xf32>
    %174 = arith.subf %173, %172 : vector<2x128xf32>
    %cst_53 = arith.constant 5.000000e-01 : f32
    %175 = vector.broadcast %cst_53 : f32 to vector<2x128xf32>
    %176 = arith.mulf %174, %175 : vector<2x128xf32>
    %177 = arith.addf %172, %176 : vector<2x128xf32>
    %cst_54 = arith.constant 1.000000e+00 : f32
    %178 = vector.broadcast %cst_54 : f32 to vector<2x128xf32>
    %179 = arith.cmpf oge, %177, %178 : vector<2x128xf32>
    %180 = arith.extui %179 : vector<2x128xi1> to vector<2x128xi32>
    %181 = arith.sitofp %180 : vector<2x128xi32> to vector<2x128xf32>
    %182 = tpu.concatenate %104, %115, %126, %137, %148, %159, %170, %181 in 0 : vector<2x128xf32>, vector<2x128xf32>, vector<2x128xf32>, vector<2x128xf32>, vector<2x128xf32>, vector<2x128xf32>, vector<2x128xf32>, vector<2x128xf32> -> vector<16x128xf32>
    %c0_55 = arith.constant 0 : index
    %c0_56 = arith.constant 0 : index
    %183 = vector.load %arg3[%c0_55, %c0_56] : memref<16x128xf32, #tpu.memory_space<vmem>>, vector<16x128xf32>
    tpu.vector_store %arg3[%c0_55, %c0_56], %182 {strides = array<i32>} : memref<16x128xf32, #tpu.memory_space<vmem>>, vector<16x128xf32>,
    return
  }
  func.func @transform_0(%arg0: i32) -> (i32, i32) {
    %c0_i32 = arith.constant 0 : i32
    %c0_i32_0 = arith.constant 0 : i32
    %c0_i32_1 = arith.constant 0 : i32
    return %c0_i32, %c0_i32_0 : i32, i32
  }
  func.func @transform_1(%arg0: i32) -> (i32, i32, i32) {
    %c0_i32 = arith.constant 0 : i32
    %c0_i32_0 = arith.constant 0 : i32
    %c0_i32_1 = arith.constant 0 : i32
    %c0_i32_2 = arith.constant 0 : i32
    return %c0_i32, %c0_i32_0, %c0_i32_1 : i32, i32, i32
  }
  func.func @transform_2(%arg0: i32) -> (i32, i32) {
    %c0_i32 = arith.constant 0 : i32
    %c0_i32_0 = arith.constant 0 : i32
    %c0_i32_1 = arith.constant 0 : i32
    return %c0_i32, %c0_i32_0 : i32, i32
  }
}

</mosaic_0001>

<llo_original>
// kernel: tpu_custom_call.1
$region0: #{tpu_custom_call.1}
  #allocation0 [shape = 'u32[]', space=smem, size = 0x4, offset = 0x4, fixed_abs, tag = 'smem constant byte address 0x4 - core index']
  #allocation1 [shape = 'u32[144,128]{1,0:T(1,128)}', space=vmem, size = 0x12000, scoped, tag = 'internal scratch']
  %s0 = inlined_call_operand.hbm [shape: f32[16,128], index: 0, kind: input, shape index: {}]
  %s1 = inlined_call_operand.hbm [shape: f32[2,128,128], index: 1, kind: input, shape index: {}]
  %s2 = inlined_call_operand.hbm [shape: f32[16,128], index: 2, kind: output, shape index: {}]
  %s3 = sld [smem:[#allocation0]]
  $region26: #{tpu_custom_call.1} parent=0
    _
  %s5 = ssub.s32 1, %s3
  %s6 = scalar_select 0, %s5, %s3
  $region1: #{tpu_custom_call.1} parent=0
    #allocation2 [shape = 'u8[8192]{0}', space=vmem, size = 0x2000, scoped, tag = 'input window, operand 0, single buffered']
    #allocation3 [shape = 's32[1]{0}', space=sflag, size = 0x4, scoped, tag = 'scoped memory for tpu_custom_call.1']
    #allocation4 [shape = 's32[1]{0}', space=sflag, size = 0x4, scoped, tag = 'scoped memory for tpu_custom_call.1']
    #allocation5 [shape = 'u8[131072]{0}', space=vmem, size = 0x20000, scoped, tag = 'input window, operand 1, single buffered']
    #allocation6 [shape = 's32[1]{0}', space=sflag, size = 0x4, scoped, tag = 'scoped memory for tpu_custom_call.1']
    #allocation7 [shape = 'u8[8192]{0}', space=vmem, size = 0x2000, scoped, tag = 'output window, operand 0, single buffered']
    %7 = vsyncpa [#allocation3], 0
    %8 = vsyncpa [#allocation6], 0
    %9 = vsyncpa [#allocation4], 0
    // Predicated region
    $region2: #{tpu_custom_call.1} parent=1 // pred_check
      _
    $region3: #{tpu_custom_call.1} parent=1 // pred_check_branch
      %11 = sbr.rel (0) target = $region5
    $region4: #{tpu_custom_call.1} parent=1 // pred_region
      %s13 = ssub.s32 256, 256
      %14 = vsyncadd [#allocation3], %s13
      %s15 = sshll.u32 [#allocation2], 4
      %s16 = int_to_ptr.vmem [resolvable:$true] %s15
      %21 = dma.hbm_to_vmem [thread:$0]  %s0, 256, %s16, [#allocation3], 128, 128, 8
    $region5: #{tpu_custom_call.1} parent=1 // pred_fallthru
      _
    // Predicated region
    $region6: #{tpu_custom_call.1} parent=1 // pred_check
      _
    $region7: #{tpu_custom_call.1} parent=1 // pred_check_branch
      %23 = sbr.rel (0) target = $region9
    $region8: #{tpu_custom_call.1} parent=1 // pred_region
      %s25 = ssub.s32 4096, 4096
      %26 = vsyncadd [#allocation6], %s25
      %s27 = sshll.u32 [#allocation5], 4
      %s28 = int_to_ptr.vmem [resolvable:$true] %s27
      %33 = dma.hbm_to_vmem [thread:$0]  %s1, 4096, %s28, [#allocation6], 128, 128, 8
    $region9: #{tpu_custom_call.1} parent=1 // pred_fallthru
      _
    // Predicated region
    $region10: #{tpu_custom_call.1} parent=1 // pred_check
      _
    $region11: #{tpu_custom_call.1} parent=1 // pred_check_branch
      %35 = sbr.rel (0) target = $region13
    $region12: #{tpu_custom_call.1} parent=1 // pred_region
      %36 = dma.done [#allocation3], 256
    $region13: #{tpu_custom_call.1} parent=1 // pred_fallthru
      _
    // Predicated region
    $region14: #{tpu_custom_call.1} parent=1 // pred_check
      _
    $region15: #{tpu_custom_call.1} parent=1 // pred_check_branch
      %38 = sbr.rel (0) target = $region17
    $region16: #{tpu_custom_call.1} parent=1 // pred_region
      %39 = dma.done [#allocation6], 4096
    $region17: #{tpu_custom_call.1} parent=1 // pred_fallthru
      _
    %v40 = vld [vmem:[#allocation2] sm:$0xff]
    %v41 = vld [vmem:[#allocation2 + $0x8] sm:$0xff]
    %v42 = vld [vmem:[#allocation5] sm:$0xff]
    %v43 = vld [vmem:[#allocation5 + $0x8] sm:$0xff]
    %v44 = vld [vmem:[#allocation5 + $0x10] sm:$0xff]
    %v45 = vld [vmem:[#allocation5 + $0x18] sm:$0xff]
    %v46 = vld [vmem:[#allocation5 + $0x20] sm:$0xff]
    %v47 = vld [vmem:[#allocation5 + $0x28] sm:$0xff]
    %v48 = vld [vmem:[#allocation5 + $0x30] sm:$0xff]
    %v49 = vld [vmem:[#allocation5 + $0x38] sm:$0xff]
    %v50 = vld [vmem:[#allocation5 + $0x40] sm:$0xff]
    %v51 = vld [vmem:[#allocation5 + $0x48] sm:$0xff]
    %v52 = vld [vmem:[#allocation5 + $0x50] sm:$0xff]
    %v53 = vld [vmem:[#allocation5 + $0x58] sm:$0xff]
    %v54 = vld [vmem:[#allocation5 + $0x60] sm:$0xff]
    %v55 = vld [vmem:[#allocation5 + $0x68] sm:$0xff]
    %v56 = vld [vmem:[#allocation5 + $0x70] sm:$0xff]
    %v57 = vld [vmem:[#allocation5 + $0x78] sm:$0xff]
    %58 = vmatprep.subr.mxu0 0.0
    %59 = vmatpush1.msra.mxu0 %v42
    %60 = vmatprep.subr.mxu0 0.0
    %61 = vmatpush1.msra.mxu0 %v43
    %62 = vmatprep.subr.mxu0 0.0
    %63 = vmatpush1.msra.mxu0 %v44
    %64 = vmatprep.subr.mxu0 0.0
    %65 = vmatpush1.msra.mxu0 %v45
    %66 = vmatprep.subr.mxu0 0.0
    %67 = vmatpush1.msra.mxu0 %v46
    %68 = vmatprep.subr.mxu0 0.0
    %69 = vmatpush1.msra.mxu0 %v47
    %70 = vmatprep.subr.mxu0 0.0
    %71 = vmatpush1.msra.mxu0 %v48
    %72 = vmatprep.subr.mxu0 0.0
    %73 = vmatpush1.msra.mxu0 %v49
    %74 = vmatprep.subr.mxu0 0.0
    %75 = vmatpush1.msra.mxu0 %v50
    %76 = vmatprep.subr.mxu0 0.0
    %77 = vmatpush1.msra.mxu0 %v51
    %78 = vmatprep.subr.mxu0 0.0
    %79 = vmatpush1.msra.mxu0 %v52
    %80 = vmatprep.subr.mxu0 0.0
    %81 = vmatpush1.msra.mxu0 %v53
    %82 = vmatprep.subr.mxu0 0.0
    %83 = vmatpush1.msra.mxu0 %v54
    %84 = vmatprep.subr.mxu0 0.0
    %85 = vmatpush1.msra.mxu0 %v55
    %86 = vmatprep.subr.mxu0 0.0
    %87 = vmatpush1.msra.mxu0 %v56
    %88 = vmatprep.subr.mxu0 0.0
    %89 = vmatpush1.msra.mxu0 %v57
    %90 = vmatprep.subr.mxu0 0.0
    %91 = vmatpush1.msra.mxu0 0.0
    %92 = vmatprep.subr.mxu0 0.0
    %93 = vmatpush1.msra.mxu0 0.0
    %94 = vmatprep.subr.mxu0 0.0
    %95 = vmatpush1.msra.mxu0 0.0
    %96 = vmatprep.subr.mxu0 0.0
    %97 = vmatpush1.msra.mxu0 0.0
    %98 = vmatprep.subr.mxu0 0.0
    %99 = vmatpush1.msra.mxu0 0.0
    %100 = vmatprep.subr.mxu0 0.0
    %101 = vmatpush1.msra.mxu0 0.0
    %102 = vmatprep.subr.mxu0 0.0
    %103 = vmatpush1.msra.mxu0 0.0
    %104 = vmatprep.subr.mxu0 0.0
    %105 = vmatpush1.msra.mxu0 0.0
    %106 = vmatprep.subr.mxu0 0.0
    %107 = vmatpush1.msra.mxu0 0.0
    %108 = vmatprep.subr.mxu0 0.0
    %109 = vmatpush1.msra.mxu0 0.0
    %110 = vmatprep.subr.mxu0 0.0
    %111 = vmatpush1.msra.mxu0 0.0
    %112 = vmatprep.subr.mxu0 0.0
    %113 = vmatpush1.msra.mxu0 0.0
    %114 = vmatprep.subr.mxu0 0.0
    %115 = vmatpush1.msra.mxu0 0.0
    %116 = vmatprep.subr.mxu0 0.0
    %117 = vmatpush1.msra.mxu0 0.0
    %118 = vmatprep.subr.mxu0 0.0
    %119 = vmatpush1.msra.mxu0 0.0
    %120 = vmatprep.subr.mxu0 0.0
    %121 = vmatpush1.msra.mxu0 0.0
    %122 = vmatprep.mubr.f32.mxu0 0.0
    %123 = vmatmul.mubr.f32.gmra.mrb[0].mxu0 %v40
    %v124 = vpop.f32.mrb[0].mxu0
    %v125 = vadd.f32 0.0, %v124
    %v126 = vpop.f32.mrb[0].mxu0
    %127 = vmatprep.mubr.f32.mxu0 0.0
    %128 = vmatmul.mubr.f32.gmra.mrb[0].mxu0 %v41
    %v129 = vpop.f32.mrb[0].mxu0
    %v130 = vadd.f32 0.0, %v129
    %v131 = vpop.f32.mrb[0].mxu0
    %132 = vdwg.mxu0
    %v133 = vmul.f32 %v125, 0.5
    %v134 = vadd.f32 %v133, 0.0
    %vm135 = vcmp.ge.f32.partialorder %v134, 1.0
    %v136 = vsel %vm135, 1, 0
    %v137 = vcvt.s32.f32 %v136
    %v138 = vsel %vm135, 0.0, %v134
    %v140 = vrot.slane %v138, 6
    %v142 = vsub.f32 %v125, %v140
    %v143 = vmul.f32 %v142, 0.5
    %v145 = vrot.slane %v143, 2
    %v147 = vadd.f32 %v138, %v145
    %vm148 = vcmp.ge.f32.partialorder %v147, 1.0
    %v149 = vsel %vm148, 1, 0
    %v150 = vcvt.s32.f32 %v149
    %v151 = vsel %vm148, 0.0, %v147
    %v153 = vrot.slane %v151, 4
    %v155 = vsub.f32 %v125, %v153
    %v156 = vmul.f32 %v155, 0.5
    %v158 = vrot.slane %v156, 4
    %v160 = vadd.f32 %v151, %v158
    %vm161 = vcmp.ge.f32.partialorder %v160, 1.0
    %v162 = vsel %vm161, 1, 0
    %v163 = vcvt.s32.f32 %v162
    %v164 = vsel %vm161, 0.0, %v160
    %v166 = vrot.slane %v164, 2
    %v168 = vsub.f32 %v125, %v166
    %v169 = vmul.f32 %v168, 0.5
    %v171 = vrot.slane %v169, 6
    %v173 = vadd.f32 %v164, %v171
    %vm174 = vcmp.ge.f32.partialorder %v173, 1.0
    %v175 = vsel %vm174, 1, 0
    %v176 = vcvt.s32.f32 %v175
    %v177 = vsel %vm174, 0.0, %v173
    %v178 = vsub.f32 %v130, %v177
    %v179 = vmul.f32 %v178, 0.5
    %v180 = vadd.f32 %v177, %v179
    %vm181 = vcmp.ge.f32.partialorder %v180, 1.0
    %v182 = vsel %vm181, 1, 0
    %v183 = vcvt.s32.f32 %v182
    %v184 = vsel %vm181, 0.0, %v180
    %v186 = vrot.slane %v184, 6
    %v188 = vsub.f32 %v130, %v186
    %v189 = vmul.f32 %v188, 0.5
    %v191 = vrot.slane %v189, 2
    %v193 = vadd.f32 %v184, %v191
    %vm194 = vcmp.ge.f32.partialorder %v193, 1.0
    %v195 = vsel %vm194, 1, 0
    %v196 = vcvt.s32.f32 %v195
    %v197 = vsel %vm194, 0.0, %v193
    %v199 = vrot.slane %v197, 4
    %v201 = vsub.f32 %v130, %v199
    %v202 = vmul.f32 %v201, 0.5
    %v204 = vrot.slane %v202, 4
    %v206 = vadd.f32 %v197, %v204
    %vm207 = vcmp.ge.f32.partialorder %v206, 1.0
    %v208 = vsel %vm207, 1, 0
    %v209 = vcvt.s32.f32 %v208
    %v210 = vsel %vm207, 0.0, %v206
    %v212 = vrot.slane %v210, 2
    %v214 = vsub.f32 %v130, %v212
    %v215 = vmul.f32 %v214, 0.5
    %v217 = vrot.slane %v215, 6
    %v219 = vadd.f32 %v210, %v217
    %vm220 = vcmp.ge.f32.partialorder %v219, 1.0
    %v221 = vsel %vm220, 1, 0
    %v222 = vcvt.s32.f32 %v221
    %v224 = vrot.slane %v150, 6
    %v227 = vrot.slane %v163, 4
    %v230 = vrot.slane %v176, 2
    %v233 = vrot.slane %v196, 6
    %v236 = vrot.slane %v209, 4
    %v239 = vrot.slane %v222, 2
    %vm241 = vcmask 1041408
    %v242 = vsel %vm241, %v137, %v224
    %vm243 = vcmask 1043456
    %v244 = vsel %vm243, %v242, %v227
    %vm245 = vcmask 1045504
    %v246 = vsel %vm245, %v244, %v230
    %v247 = vsel %vm241, %v183, %v233
    %v248 = vsel %vm243, %v247, %v236
    %v249 = vsel %vm245, %v248, %v239
    %s250 = scalar_lea.vmem [#allocation5], 128
    %v251 = vld [vmem:[%s250] sm:$0xff]
    %v252 = vld [vmem:[%s250 + $0x8] sm:$0xff]
    %v253 = vld [vmem:[%s250 + $0x10] sm:$0xff]
    %v254 = vld [vmem:[%s250 + $0x18] sm:$0xff]
    %v255 = vld [vmem:[%s250 + $0x20] sm:$0xff]
    %v256 = vld [vmem:[%s250 + $0x28] sm:$0xff]
    %v257 = vld [vmem:[%s250 + $0x30] sm:$0xff]
    %v258 = vld [vmem:[%s250 + $0x38] sm:$0xff]
    %v259 = vld [vmem:[%s250 + $0x40] sm:$0xff]
    %v260 = vld [vmem:[%s250 + $0x48] sm:$0xff]
    %v261 = vld [vmem:[%s250 + $0x50] sm:$0xff]
    %v262 = vld [vmem:[%s250 + $0x58] sm:$0xff]
    %v263 = vld [vmem:[%s250 + $0x60] sm:$0xff]
    %v264 = vld [vmem:[%s250 + $0x68] sm:$0xff]
    %v265 = vld [vmem:[%s250 + $0x70] sm:$0xff]
    %v266 = vld [vmem:[%s250 + $0x78] sm:$0xff]
    %267 = vmatprep.subr.mxu0 0.0
    %268 = vmatpush1.msra.mxu0 %v251
    %269 = vmatprep.subr.mxu0 0.0
    %270 = vmatpush1.msra.mxu0 %v252
    %271 = vmatprep.subr.mxu0 0.0
    %272 = vmatpush1.msra.mxu0 %v253
    %273 = vmatprep.subr.mxu0 0.0
    %274 = vmatpush1.msra.mxu0 %v254
    %275 = vmatprep.subr.mxu0 0.0
    %276 = vmatpush1.msra.mxu0 %v255
    %277 = vmatprep.subr.mxu0 0.0
    %278 = vmatpush1.msra.mxu0 %v256
    %279 = vmatprep.subr.mxu0 0.0
    %280 = vmatpush1.msra.mxu0 %v257
    %281 = vmatprep.subr.mxu0 0.0
    %282 = vmatpush1.msra.mxu0 %v258
    %283 = vmatprep.subr.mxu0 0.0
    %284 = vmatpush1.msra.mxu0 %v259
    %285 = vmatprep.subr.mxu0 0.0
    %286 = vmatpush1.msra.mxu0 %v260
    %287 = vmatprep.subr.mxu0 0.0
    %288 = vmatpush1.msra.mxu0 %v261
    %289 = vmatprep.subr.mxu0 0.0
    %290 = vmatpush1.msra.mxu0 %v262
    %291 = vmatprep.subr.mxu0 0.0
    %292 = vmatpush1.msra.mxu0 %v263
    %293 = vmatprep.subr.mxu0 0.0
    %294 = vmatpush1.msra.mxu0 %v264
    %295 = vmatprep.subr.mxu0 0.0
    %296 = vmatpush1.msra.mxu0 %v265
    %297 = vmatprep.subr.mxu0 0.0
    %298 = vmatpush1.msra.mxu0 %v266
    %299 = vmatprep.subr.mxu0 0.0
    %300 = vmatpush1.msra.mxu0 0.0
    %301 = vmatprep.subr.mxu0 0.0
    %302 = vmatpush1.msra.mxu0 0.0
    %303 = vmatprep.subr.mxu0 0.0
    %304 = vmatpush1.msra.mxu0 0.0
    %305 = vmatprep.subr.mxu0 0.0
    %306 = vmatpush1.msra.mxu0 0.0
    %307 = vmatprep.subr.mxu0 0.0
    %308 = vmatpush1.msra.mxu0 0.0
    %309 = vmatprep.subr.mxu0 0.0
    %310 = vmatpush1.msra.mxu0 0.0
    %311 = vmatprep.subr.mxu0 0.0
    %312 = vmatpush1.msra.mxu0 0.0
    %313 = vmatprep.subr.mxu0 0.0
    %314 = vmatpush1.msra.mxu0 0.0
    %315 = vmatprep.subr.mxu0 0.0
    %316 = vmatpush1.msra.mxu0 0.0
    %317 = vmatprep.subr.mxu0 0.0
    %318 = vmatpush1.msra.mxu0 0.0
    %319 = vmatprep.subr.mxu0 0.0
    %320 = vmatpush1.msra.mxu0 0.0
    %321 = vmatprep.subr.mxu0 0.0
    %322 = vmatpush1.msra.mxu0 0.0
    %323 = vmatprep.subr.mxu0 0.0
    %324 = vmatpush1.msra.mxu0 0.0
    %325 = vmatprep.subr.mxu0 0.0
    %326 = vmatpush1.msra.mxu0 0.0
    %327 = vmatprep.subr.mxu0 0.0
    %328 = vmatpush1.msra.mxu0 0.0
    %329 = vmatprep.subr.mxu0 0.0
    %330 = vmatpush1.msra.mxu0 0.0
    %331 = vmatprep.mubr.f32.mxu0 0.0
    %332 = vmatmul.mubr.f32.gmra.mrb[0].mxu0 %v246
    %v333 = vpop.f32.mrb[0].mxu0
    %v334 = vadd.f32 0.0, %v333
    %v335 = vpop.f32.mrb[0].mxu0
    %336 = vmatprep.mubr.f32.mxu0 0.0
    %337 = vmatmul.mubr.f32.gmra.mrb[0].mxu0 %v249
    %v338 = vpop.f32.mrb[0].mxu0
    %v339 = vadd.f32 0.0, %v338
    %v340 = vpop.f32.mrb[0].mxu0
    %341 = vdwg.mxu0
    %v342 = vmul.f32 %v334, 0.5
    %v343 = vadd.f32 %v342, 0.0
    %vm344 = vcmp.ge.f32.partialorder %v343, 1.0
    %v345 = vsel %vm344, 1, 0
    %v346 = vcvt.s32.f32 %v345
    %v347 = vsel %vm344, 0.0, %v343
    %v349 = vrot.slane %v347, 6
    %v351 = vsub.f32 %v334, %v349
    %v352 = vmul.f32 %v351, 0.5
    %v354 = vrot.slane %v352, 2
    %v356 = vadd.f32 %v347, %v354
    %vm357 = vcmp.ge.f32.partialorder %v356, 1.0
    %v358 = vsel %vm357, 1, 0
    %v359 = vcvt.s32.f32 %v358
    %v360 = vsel %vm357, 0.0, %v356
    %v362 = vrot.slane %v360, 4
    %v364 = vsub.f32 %v334, %v362
    %v365 = vmul.f32 %v364, 0.5
    %v367 = vrot.slane %v365, 4
    %v369 = vadd.f32 %v360, %v367
    %vm370 = vcmp.ge.f32.partialorder %v369, 1.0
    %v371 = vsel %vm370, 1, 0
    %v372 = vcvt.s32.f32 %v371
    %v373 = vsel %vm370, 0.0, %v369
    %v375 = vrot.slane %v373, 2
    %v377 = vsub.f32 %v334, %v375
    %v378 = vmul.f32 %v377, 0.5
    %v380 = vrot.slane %v378, 6
    %v382 = vadd.f32 %v373, %v380
    %vm383 = vcmp.ge.f32.partialorder %v382, 1.0
    %v384 = vsel %vm383, 1, 0
    %v385 = vcvt.s32.f32 %v384
    %v386 = vsel %vm383, 0.0, %v382
    %v387 = vsub.f32 %v339, %v386
    %v388 = vmul.f32 %v387, 0.5
    %v389 = vadd.f32 %v386, %v388
    %vm390 = vcmp.ge.f32.partialorder %v389, 1.0
    %v391 = vsel %vm390, 1, 0
    %v392 = vcvt.s32.f32 %v391
    %v393 = vsel %vm390, 0.0, %v389
    %v395 = vrot.slane %v393, 6
    %v397 = vsub.f32 %v339, %v395
    %v398 = vmul.f32 %v397, 0.5
    %v400 = vrot.slane %v398, 2
    %v402 = vadd.f32 %v393, %v400
    %vm403 = vcmp.ge.f32.partialorder %v402, 1.0
    %v404 = vsel %vm403, 1, 0
    %v405 = vcvt.s32.f32 %v404
    %v406 = vsel %vm403, 0.0, %v402
    %v408 = vrot.slane %v406, 4
    %v410 = vsub.f32 %v339, %v408
    %v411 = vmul.f32 %v410, 0.5
    %v413 = vrot.slane %v411, 4
    %v415 = vadd.f32 %v406, %v413
    %vm416 = vcmp.ge.f32.partialorder %v415, 1.0
    %v417 = vsel %vm416, 1, 0
    %v418 = vcvt.s32.f32 %v417
    %v419 = vsel %vm416, 0.0, %v415
    %v421 = vrot.slane %v419, 2
    %v423 = vsub.f32 %v339, %v421
    %v424 = vmul.f32 %v423, 0.5
    %v426 = vrot.slane %v424, 6
    %v428 = vadd.f32 %v419, %v426
    %vm429 = vcmp.ge.f32.partialorder %v428, 1.0
    %v430 = vsel %vm429, 1, 0
    %v431 = vcvt.s32.f32 %v430
    %v433 = vrot.slane %v359, 6
    %v436 = vrot.slane %v372, 4
    %v439 = vrot.slane %v385, 2
    %v442 = vrot.slane %v405, 6
    %v445 = vrot.slane %v418, 4
    %v448 = vrot.slane %v431, 2
    %v450 = vsel %vm241, %v346, %v433
    %v451 = vsel %vm243, %v450, %v436
    %v452 = vsel %vm245, %v451, %v439
    %v453 = vsel %vm241, %v392, %v442
    %v454 = vsel %vm243, %v453, %v445
    %v455 = vsel %vm245, %v454, %v448
    %456 = vst [vmem:[#allocation7] sm:$0xff] %v452
    %457 = vst [vmem:[#allocation7 + $0x8] sm:$0xff] %v455
    // Predicated region
    $region18: #{tpu_custom_call.1} parent=1 // pred_check
      _
    $region19: #{tpu_custom_call.1} parent=1 // pred_check_branch
      %459 = sbr.rel (0) target = $region21
    $region20: #{tpu_custom_call.1} parent=1 // pred_region
      %s461 = ssub.s32 256, 256
      %462 = vsyncadd [#allocation4], %s461
      %s463 = sshll.u32 [#allocation7], 4
      %s464 = int_to_ptr.vmem [resolvable:$true] %s463
      %469 = dma.vmem_to_hbm [thread:$0]  %s464, 256, %s2, [#allocation4], 128, 128, 8
    $region21: #{tpu_custom_call.1} parent=1 // pred_fallthru
      _
    // Predicated region
    $region22: #{tpu_custom_call.1} parent=1 // pred_check
      _
    $region23: #{tpu_custom_call.1} parent=1 // pred_check_branch
      %471 = sbr.rel (0) target = $region25
    $region24: #{tpu_custom_call.1} parent=1 // pred_region
      %472 = dma.done [#allocation4], 256
    $region25: #{tpu_custom_call.1} parent=1 // pred_fallthru
      _
    %473 = vsyncpa [#allocation3], 1
    %474 = vsyncpa [#allocation6], 1
    %475 = vsyncpa [#allocation4], 1

</llo_original>
